<compile_context>
chip_gen: v7x
topology: tpu7x:2x2x1
jax: 0.10.0
libtpu: 0.0.40
codegen_flags: <defaults>
</compile_context>

<pallas_src>
import functools

import jax
import jax.numpy as jnp
from jax.experimental import pallas as pl
from jax.experimental.pallas import tpu as pltpu


LANE = 128                       # channel padding target (lane width)
M_TILE = 1024                    # M-tile (rows); raised from 512 per review
C_TILE_MAX = 512                 # K/N tile cap: multiple of 256 (v6e/v7x MXU)
VMEM_LIMIT = 48 * 1024 * 1024    # scoped-VMEM budget; below v7x physical 64 MiB


def _round_up(x: int, m: int) -> int:
    return (x + m - 1) // m * m


def _m_tile(m: int) -> int:
    tm = min(M_TILE, m)
    assert m % tm == 0, f"M={m} must be a multiple of tile {tm}"
    return tm


def _c_tile(c: int) -> int:
    # largest of (512, 256, 128) dividing c; c is always a multiple of LANE
    for t in (C_TILE_MAX, 256, LANE):
        if c % t == 0:
            return min(t, c)
    return c


# ----------------------------------------------------------------------------
# Standalone per-tensor abs-max (only needed for the FIRST op of a chain).
# Fully "parallel" grid (megacore-friendly on v7x); emits lane-dense per-tile
# partial maxima, the tiny final reduce happens outside Pallas.
# ----------------------------------------------------------------------------
def _amax_kernel(x_ref, amax_ref, *, relu_in):
    x = x_ref[...]
    if relu_in:
        x = jnp.maximum(x, 0.0)
    part = jnp.max(jnp.abs(x), axis=0, keepdims=True)          # (1, tc)
    amax_ref[...] = jnp.broadcast_to(part, amax_ref.shape)     # (8, tc) full-lane store


def amax_pallas(x2d: jax.Array, relu_in: bool = False) -> jax.Array:
    """x2d: (M, C) f32 -> (8*gm, C) f32 per-tile abs-max partials."""
    M, C = x2d.shape
    tm, tc = _m_tile(M), _c_tile(C)
    gm, gc = M // tm, C // tc
    return pl.pallas_call(
        functools.partial(_amax_kernel, relu_in=relu_in),
        out_shape=jax.ShapeDtypeStruct((8 * gm, C), jnp.float32),
        grid=(gm, gc),
        in_specs=[pl.BlockSpec((tm, tc), lambda i, j: (i, j))],
        out_specs=pl.BlockSpec((8, tc), lambda i, j: (i, j)),
        compiler_params=pltpu.CompilerParams(
            dimension_semantics=("parallel", "parallel"),
            vmem_limit_bytes=VMEM_LIMIT),
    )(x2d)


# ----------------------------------------------------------------------------
# Fused fake-quantize + 1x1-conv matmul.
#   optional ReLU prologue (fused preceding QuantReLU)
#   optional ReLU epilogue (fused following QuantReLU)
#   fused abs-max of the OUTPUT (lane-dense partials) for the next layer.
# Grid: (M tiles, Cout tiles, Cin tiles); K (Cin) last and "arbitrary".
# ----------------------------------------------------------------------------
def _qconv_kernel(qp_ref, x_ref, w_ref, o_ref, amax_ref, acc_ref, *,
                  qmax, mxu_dtype, relu_in, relu_out):
    k = pl.program_id(2)

    @pl.when(k == 0)
    def _():
        acc_ref[...] = jnp.zeros_like(acc_ref)

    inv_scale = qp_ref[0]                         # scalars from SMEM
    x = x_ref[...]                                # (tm, tk) f32
    if relu_in:
        x = jnp.maximum(x, 0.0)
    # symmetric fake quant in f32 on the VPU; clip to [-qmax, qmax]
    xq = jnp.clip(jnp.round(x * inv_scale), -qmax, qmax)
    # MXU matmul (bf16 operands exact for qmax <= 256, else f32); dequant is
    # factored out of the (M, Cin) path into the (M, Cout) epilogue.
    acc_ref[...] += jnp.dot(xq.astype(mxu_dtype), w_ref[...].astype(mxu_dtype),
                            preferred_element_type=jnp.float32)

    @pl.when(k == pl.num_programs(2) - 1)
    def _():
        y = acc_ref[...] * qp_ref[1]
        if relu_out:
            y = jnp.maximum(y, 0.0)
        o_ref[...] = y
        # fused per-tile abs-max of the output (what the next layer quantizes)
        part = jnp.max(jnp.abs(y), axis=0, keepdims=True)       # (1, tn)
        amax_ref[...] = jnp.broadcast_to(part, amax_ref.shape)  # (8, tn)


def qconv_pallas(x2d: jax.Array, w_pad: jax.Array, qparams: jax.Array,
                 qmax: float, relu_in: bool, relu_out: bool):
    """x2d: (M, Cin) f32, w_pad: (Cin, Cout) bf16, qparams: (2,) f32 in SMEM.
    Returns (y2d (M, Cout) f32, amax partials (8*gm, Cout) f32)."""
    M, Cin = x2d.shape
    Cout = w_pad.shape[1]
    tm = _m_tile(M)
    tk = _c_tile(Cin)
    tn = _c_tile(Cout)
    gm, gn, gk = M // tm, Cout // tn, Cin // tk
    mxu_dtype = jnp.bfloat16 if qmax <= 256 else jnp.float32
    kernel = functools.partial(_qconv_kernel, qmax=qmax, mxu_dtype=mxu_dtype,
                               relu_in=relu_in, relu_out=relu_out)
    cost = pl.CostEstimate(
        flops=2 * M * Cin * Cout,
        transcendentals=0,
        bytes_accessed=4 * M * Cin + 4 * M * Cout
                       + w_pad.dtype.itemsize * Cin * Cout,
    )
    y, amax_part = pl.pallas_call(
        kernel,
        out_shape=(jax.ShapeDtypeStruct((M, Cout), jnp.float32),
                   jax.ShapeDtypeStruct((8 * gm, Cout), jnp.float32)),
        grid=(gm, gn, gk),
        in_specs=[
            pl.BlockSpec(memory_space=pltpu.MemorySpace.SMEM),   # qparams (2,)
            pl.BlockSpec((tm, tk), lambda m, n, k: (m, k)),      # activation
            pl.BlockSpec((tk, tn), lambda m, n, k: (k, n)),      # weights
        ],
        out_specs=[
            pl.BlockSpec((tm, tn), lambda m, n, k: (m, n)),      # output
            pl.BlockSpec((8, tn), lambda m, n, k: (m, n)),       # amax partials
        ],
        scratch_shapes=[pltpu.VMEM((tm, tn), jnp.float32)],
        compiler_params=pltpu.CompilerParams(
            dimension_semantics=("parallel", "parallel", "arbitrary"),
            vmem_limit_bytes=VMEM_LIMIT),
        cost_estimate=cost,
    )(qparams, x2d, w_pad)
    return y, amax_part


# ----------------------------------------------------------------------------
# Standalone elementwise ReLU (only used when not adjacent to a conv).
# ----------------------------------------------------------------------------
def _relu_kernel(x_ref, o_ref):
    o_ref[...] = jnp.maximum(x_ref[...], 0.0)


def relu_pallas(x2d: jax.Array) -> jax.Array:
    M, C = x2d.shape
    tm, tc = _m_tile(M), _c_tile(C)
    return pl.pallas_call(
        _relu_kernel,
        out_shape=jax.ShapeDtypeStruct((M, C), jnp.float32),
        grid=(M // tm, C // tc),
        in_specs=[pl.BlockSpec((tm, tc), lambda i, j: (i, j))],
        out_specs=pl.BlockSpec((tm, tc), lambda i, j: (i, j)),
        compiler_params=pltpu.CompilerParams(
            dimension_semantics=("parallel", "parallel"),
            vmem_limit_bytes=VMEM_LIMIT),
    )(x2d)


# ----------------------------------------------------------------------------
# Ops: operate on the shared lane-dense 2D layout (M_pad, C_pad).
# NOTE: correctness of the per-tensor abs-max over the padded buffer relies on
# all padded rows / channels being exactly zero (true here: zero-padded inputs
# and zero weight columns; there is no bias).  The ops return the PyTorch
# (x, x_scale, x_bit) triple plus a fused abs-max carry used by the container.
# ----------------------------------------------------------------------------
class QuantPointwiseConv:
    def __init__(self, c_in: int, c_out: int, key: jax.Array):
        self.c_in = c_in
        self.c_out = c_out
        cin_p = _round_up(c_in, LANE)
        cout_p = _round_up(c_out, LANE)
        # deterministic synthetic weights; zero-padded channels, bf16 for MXU
        w = jax.random.normal(key, (c_in, c_out), dtype=jnp.float32) * 0.1
        w_pad = jnp.zeros((cin_p, cout_p), jnp.float32).at[:c_in, :c_out].set(w)
        self.w_pad = w_pad.astype(jnp.bfloat16)
        # TODO(synk): optional pre-quantized int8 weights (W8A8 MXU path) for
        # v5e/v6e; v7x has no integer MXU path so bf16 stays the default.

    def __call__(self, x2d, x_scale=None, iter=0, quantized_bit=8,
                 fuse_relu_in=False, fuse_relu_out=False, in_amax_partial=None):
        qmax = float(2 ** (int(quantized_bit) - 1) - 1)
        if in_amax_partial is None:
            # only the first op of a chain pays this extra read of x
            in_amax_partial = amax_pallas(x2d, relu_in=fuse_relu_in)
        amax = jnp.max(in_amax_partial)              # tiny reduce outside Pallas
        scale = jnp.where(amax > 0.0, amax / qmax, jnp.float32(1.0))
        inv_scale = jnp.where(amax > 0.0, qmax / amax, jnp.float32(1.0))
        qparams = jnp.stack([inv_scale, scale]).astype(jnp.float32)   # (2,) SMEM
        y2d, y_amax_partial = qconv_pallas(x2d, self.w_pad, qparams, qmax,
                                           fuse_relu_in, fuse_relu_out)
        return y2d, scale.reshape(1, 1), quantized_bit, y_amax_partial


class QuantReLU:
    def __call__(self, x2d, x_scale=None, iter=0, quantized_bit=8):
        # standalone path; adjacent-to-conv ReLUs are fused by the container
        return relu_pallas(x2d), x_scale, quantized_bit, None


# ----------------------------------------------------------------------------
# OpSequential container (forward semantics of the PyTorch module).
# One NCHW -> padded (M, Cpad) conversion at entry, one inverse at exit.
# Fusions (mathematically identical to running the ops back-to-back):
#   conv -> relu : relu folded into the conv epilogue (amax is post-relu)
#   relu -> conv : relu folded into the conv quant prologue (+ its amax pass)
#   conv -> conv : the second conv reuses the first conv's fused output abs-max
# ----------------------------------------------------------------------------
class OpSequential:
    def __init__(self, op_list):
        self.op_list = [op for op in op_list if op is not None]

    def __call__(self, x, quantized_bit, x_scale=None, iter=0):
        N, C, H, W = x.shape
        M = N * H * W
        c_pad = _round_up(C, LANE)
        tm_base = min(M_TILE, _round_up(M, 8))
        m_pad = _round_up(M, tm_base)

        # single layout conversion + pad for the whole chain
        x2d = jnp.transpose(x, (0, 2, 3, 1)).reshape(M, C)
        x2d = jnp.pad(x2d, ((0, m_pad - M), (0, c_pad - C)))

        x_bit = quantized_bit
        c_real = C
        pending_amax = None      # abs-max partials of the CURRENT x2d, if valid
        ops = self.op_list
        i = 0
        while i < len(ops):
            op = ops[i]
            if isinstance(op, QuantPointwiseConv):
                fuse_out = i + 1 < len(ops) and isinstance(ops[i + 1], QuantReLU)
                x2d, x_scale, x_bit, pending_amax = op(
                    x2d, x_scale=x_scale, iter=iter, quantized_bit=x_bit,
                    fuse_relu_out=fuse_out, in_amax_partial=pending_amax)
                c_real = op.c_out
                i += 2 if fuse_out else 1
            elif (isinstance(op, QuantReLU) and i + 1 < len(ops)
                  and isinstance(ops[i + 1], QuantPointwiseConv)):
                nxt = ops[i + 1]
                fuse_out = i + 2 < len(ops) and isinstance(ops[i + 2], QuantReLU)
                # pending_amax (pre-relu) is not valid for relu(x); the conv
                # recomputes it with the relu folded into the amax pass.
                x2d, x_scale, x_bit, pending_amax = nxt(
                    x2d, x_scale=x_scale, iter=iter, quantized_bit=x_bit,
                    fuse_relu_in=True, fuse_relu_out=fuse_out,
                    in_amax_partial=None)
                c_real = nxt.c_out
                i += 3 if fuse_out else 2
            else:
                x2d, x_scale, x_bit, pending_amax = op(
                    x2d, x_scale=x_scale, iter=iter, quantized_bit=x_bit)
                i += 1

        # drop padding, back to NCHW
        y = x2d[:M, :c_real].reshape(N, H, W, c_real)
        y = jnp.transpose(y, (0, 3, 1, 2))
        return y, x_scale, x_bit


# ----------------------------------------------------------------------------
if __name__ == "__main__":
    key = jax.random.PRNGKey(0)
    k_x, k_w1, k_w2, k_w3, k_w4 = jax.random.split(key, 5)

    N, C, H, W = 2, 4, 16, 16
    x = jax.random.normal(k_x, (N, C, H, W), dtype=jnp.float32)   # NCHW

    # chain 1: conv -> (fused epilogue) relu -> conv; the second conv consumes
    # the first conv's fused output abs-max (no standalone amax pass).
    model = OpSequential([
        QuantPointwiseConv(C, 8, k_w1),
        None,                                    # None entries are filtered out
        QuantReLU(),
        QuantPointwiseConv(8, 8, k_w2),
    ])
    y, y_scale, y_bit = model(x, quantized_bit=8, x_scale=None, iter=0)
    jax.block_until_ready(y)
    jax.block_until_ready(y_scale)
    assert y.shape == (N, 8, H, W) and y.dtype == jnp.float32
    assert y_scale.shape == (1, 1) and y_bit == 8

    # chain 2: leading relu folded into the first conv's quant prologue / amax,
    # then conv -> conv abs-max carry.
    model2 = OpSequential([QuantReLU(), QuantPointwiseConv(C, 8, k_w3),
                           QuantPointwiseConv(8, 4, k_w4)])
    y2, y2_scale, y2_bit = model2(x, quantized_bit=8, x_scale=None, iter=0)
    jax.block_until_ready(y2)
    assert y2.shape == (N, 4, H, W) and y2_bit == 8

    # chain 3: standalone elementwise ReLU (no adjacent conv to fuse into).
    model3 = OpSequential([QuantReLU()])
    y3, _, _ = model3(x, quantized_bit=8, x_scale=None, iter=0)
    jax.block_until_ready(y3)
    assert y3.shape == (N, C, H, W)

    # numerics check: single fake-quant conv against a pure-JAX reference
    conv_chk = QuantPointwiseConv(C, 8, k_w1)
    y4, s4, _ = OpSequential([conv_chk])(x, quantized_bit=8, x_scale=None, iter=0)
    jax.block_until_ready(y4)
    xt = jnp.transpose(x, (0, 2, 3, 1)).reshape(-1, C)
    amax_ref = jnp.max(jnp.abs(xt))
    scale_ref = amax_ref / 127.0
    xq_ref = jnp.clip(jnp.round(xt * (127.0 / amax_ref)), -127.0, 127.0)
    w_ref = conv_chk.w_pad[:C, :8].astype(jnp.float32)
    y_ref = (xq_ref @ w_ref) * scale_ref
    y_ref = jnp.transpose(y_ref.reshape(N, H, W, 8), (0, 3, 1, 2))
    assert jnp.allclose(y4, y_ref, rtol=1e-4, atol=1e-4), "single-conv mismatch"
    assert jnp.allclose(s4[0, 0], scale_ref, rtol=1e-3), "scale mismatch"

    print("KERNEL_OK")
</pallas_src>

<mosaic_0001>
module attributes {stable_mosaic.version = 11 : i64} {
  func.func @_amax_kernel(%arg0: i32, %arg1: i32, %arg2: memref<512x128xf32, #tpu.memory_space<vmem>>, %arg3: memref<8x128xf32, #tpu.memory_space<vmem>>) attributes {dimension_semantics = [#tpu.dimension_semantics<parallel>, #tpu.dimension_semantics<parallel>], iteration_bounds = array<i64: 1, 1>, scalar_prefetch = 0 : i64, scratch_operands = 0 : i64, tpu.core_type = #tpu.core_type<tc>, window_params = [{transform_indices = @transform_0, window_bounds = array<i64: 512, 128>}, {transform_indices = @transform_1, window_bounds = array<i64: 8, 128>}]} {
    %c0 = arith.constant 0 : index
    %c0_0 = arith.constant 0 : index
    %0 = vector.load %arg2[%c0, %c0_0] : memref<512x128xf32, #tpu.memory_space<vmem>>, vector<512x128xf32>
    %1 = math.absf %0 : vector<512x128xf32>
    %cst = arith.constant dense<0xFF800000> : vector<128xf32>
    %2 = vector.multi_reduction <maximumf>, %1, %cst [0] : vector<512x128xf32> to vector<128xf32>
    %3 = vector.shape_cast %2 : vector<128xf32> to vector<1x128xf32>
    %4 = vector.shape_cast %3 : vector<1x128xf32> to vector<1x128xf32>
    %5 = vector.broadcast %4 : vector<1x128xf32> to vector<8x128xf32>
    %c0_1 = arith.constant 0 : index
    %c0_2 = arith.constant 0 : index
    %6 = vector.load %arg3[%c0_1, %c0_2] : memref<8x128xf32, #tpu.memory_space<vmem>>, vector<8x128xf32>
    tpu.vector_store %arg3[%c0_1, %c0_2], %5 {strides = array<i32>} : memref<8x128xf32, #tpu.memory_space<vmem>>, vector<8x128xf32>,
    return
  }
  func.func @transform_0(%arg0: i32, %arg1: i32) -> (i32, i32) {
    %c0_i32 = arith.constant 0 : i32
    return %arg0, %arg1 : i32, i32
  }
  func.func @transform_1(%arg0: i32, %arg1: i32) -> (i32, i32) {
    %c0_i32 = arith.constant 0 : i32
    return %arg0, %arg1 : i32, i32
  }
}

</mosaic_0001>

<llo_original>
// kernel: tpu_custom_call.1
$region0: #{tpu_custom_call.1}
  #allocation0 [shape = 'u32[]', space=smem, size = 0x4, offset = 0x4, fixed_abs, tag = 'smem constant byte address 0x4 - core index']
  #allocation1 [shape = 'u32[144,128]{1,0:T(1,128)}', space=vmem, size = 0x12000, scoped, tag = 'internal scratch']
  %s0 = inlined_call_operand.hbm [shape: f32[512,128], index: 0, kind: input, shape index: {}]
  %s1 = inlined_call_operand.hbm [shape: f32[8,128], index: 1, kind: output, shape index: {}]
  %s2 = sld [smem:[#allocation0]]
  $region18: #{tpu_custom_call.1} parent=0
    _
  %s4 = ssub.s32 1, %s2
  %s5 = scalar_select 0, %s4, %s2
  $region1: #{tpu_custom_call.1} parent=0
    #allocation2 [shape = 'u8[262144]{0}', space=vmem, size = 0x40000, scoped, tag = 'input window, operand 0, single buffered']
    #allocation3 [shape = 's32[1]{0}', space=sflag, size = 0x4, scoped, tag = 'scoped memory for tpu_custom_call.1']
    #allocation4 [shape = 's32[1]{0}', space=sflag, size = 0x4, scoped, tag = 'scoped memory for tpu_custom_call.1']
    #allocation5 [shape = 'u8[4096]{0}', space=vmem, size = 0x1000, scoped, tag = 'output window, operand 0, single buffered']
    %6 = vsyncpa [#allocation3], 0
    %7 = vsyncpa [#allocation4], 0
    // Predicated region
    $region2: #{tpu_custom_call.1} parent=1 // pred_check
      _
    $region3: #{tpu_custom_call.1} parent=1 // pred_check_branch
      %9 = sbr.rel (0) target = $region5
    $region4: #{tpu_custom_call.1} parent=1 // pred_region
      %s11 = ssub.s32 8192, 8192
      %12 = vsyncadd [#allocation3], %s11
      %s13 = sshll.u32 [#allocation2], 4
      %s14 = int_to_ptr.vmem [resolvable:$true] %s13
      %19 = dma.hbm_to_vmem [thread:$0]  %s0, 8192, %s14, [#allocation3], 128, 128, 8
    $region5: #{tpu_custom_call.1} parent=1 // pred_fallthru
      _
    // Predicated region
    $region6: #{tpu_custom_call.1} parent=1 // pred_check
      _
    $region7: #{tpu_custom_call.1} parent=1 // pred_check_branch
      %21 = sbr.rel (0) target = $region9
    $region8: #{tpu_custom_call.1} parent=1 // pred_region
      %22 = dma.done [#allocation3], 8192
    $region9: #{tpu_custom_call.1} parent=1 // pred_fallthru
      _
    %v23 = vld [vmem:[#allocation2] sm:$0xff]
    %v24 = vld [vmem:[#allocation2 + $0x8] sm:$0xff]
    %v25 = vld [vmem:[#allocation2 + $0x10] sm:$0xff]
    %v26 = vld [vmem:[#allocation2 + $0x18] sm:$0xff]
    %v27 = vld [vmem:[#allocation2 + $0x20] sm:$0xff]
    %v28 = vld [vmem:[#allocation2 + $0x28] sm:$0xff]
    %v29 = vld [vmem:[#allocation2 + $0x30] sm:$0xff]
    %v30 = vld [vmem:[#allocation2 + $0x38] sm:$0xff]
    %v31 = vld [vmem:[#allocation2 + $0x40] sm:$0xff]
    %v32 = vld [vmem:[#allocation2 + $0x48] sm:$0xff]
    %v33 = vld [vmem:[#allocation2 + $0x50] sm:$0xff]
    %v34 = vld [vmem:[#allocation2 + $0x58] sm:$0xff]
    %v35 = vld [vmem:[#allocation2 + $0x60] sm:$0xff]
    %v36 = vld [vmem:[#allocation2 + $0x68] sm:$0xff]
    %v37 = vld [vmem:[#allocation2 + $0x70] sm:$0xff]
    %v38 = vld [vmem:[#allocation2 + $0x78] sm:$0xff]
    %v39 = vld [vmem:[#allocation2 + $0x80] sm:$0xff]
    %v40 = vld [vmem:[#allocation2 + $0x88] sm:$0xff]
    %v41 = vld [vmem:[#allocation2 + $0x90] sm:$0xff]
    %v42 = vld [vmem:[#allocation2 + $0x98] sm:$0xff]
    %v43 = vld [vmem:[#allocation2 + $0xa0] sm:$0xff]
    %v44 = vld [vmem:[#allocation2 + $0xa8] sm:$0xff]
    %v45 = vld [vmem:[#allocation2 + $0xb0] sm:$0xff]
    %v46 = vld [vmem:[#allocation2 + $0xb8] sm:$0xff]
    %v47 = vld [vmem:[#allocation2 + $0xc0] sm:$0xff]
    %v48 = vld [vmem:[#allocation2 + $0xc8] sm:$0xff]
    %v49 = vld [vmem:[#allocation2 + $0xd0] sm:$0xff]
    %v50 = vld [vmem:[#allocation2 + $0xd8] sm:$0xff]
    %v51 = vld [vmem:[#allocation2 + $0xe0] sm:$0xff]
    %v52 = vld [vmem:[#allocation2 + $0xe8] sm:$0xff]
    %v53 = vld [vmem:[#allocation2 + $0xf0] sm:$0xff]
    %v54 = vld [vmem:[#allocation2 + $0xf8] sm:$0xff]
    %v55 = vld [vmem:[#allocation2 + $0x100] sm:$0xff]
    %v56 = vld [vmem:[#allocation2 + $0x108] sm:$0xff]
    %v57 = vld [vmem:[#allocation2 + $0x110] sm:$0xff]
    %v58 = vld [vmem:[#allocation2 + $0x118] sm:$0xff]
    %v59 = vld [vmem:[#allocation2 + $0x120] sm:$0xff]
    %v60 = vld [vmem:[#allocation2 + $0x128] sm:$0xff]
    %v61 = vld [vmem:[#allocation2 + $0x130] sm:$0xff]
    %v62 = vld [vmem:[#allocation2 + $0x138] sm:$0xff]
    %v63 = vld [vmem:[#allocation2 + $0x140] sm:$0xff]
    %v64 = vld [vmem:[#allocation2 + $0x148] sm:$0xff]
    %v65 = vld [vmem:[#allocation2 + $0x150] sm:$0xff]
    %v66 = vld [vmem:[#allocation2 + $0x158] sm:$0xff]
    %v67 = vld [vmem:[#allocation2 + $0x160] sm:$0xff]
    %v68 = vld [vmem:[#allocation2 + $0x168] sm:$0xff]
    %v69 = vld [vmem:[#allocation2 + $0x170] sm:$0xff]
    %v70 = vld [vmem:[#allocation2 + $0x178] sm:$0xff]
    %v71 = vld [vmem:[#allocation2 + $0x180] sm:$0xff]
    %v72 = vld [vmem:[#allocation2 + $0x188] sm:$0xff]
    %v73 = vld [vmem:[#allocation2 + $0x190] sm:$0xff]
    %v74 = vld [vmem:[#allocation2 + $0x198] sm:$0xff]
    %v75 = vld [vmem:[#allocation2 + $0x1a0] sm:$0xff]
    %v76 = vld [vmem:[#allocation2 + $0x1a8] sm:$0xff]
    %v77 = vld [vmem:[#allocation2 + $0x1b0] sm:$0xff]
    %v78 = vld [vmem:[#allocation2 + $0x1b8] sm:$0xff]
    %v79 = vld [vmem:[#allocation2 + $0x1c0] sm:$0xff]
    %v80 = vld [vmem:[#allocation2 + $0x1c8] sm:$0xff]
    %v81 = vld [vmem:[#allocation2 + $0x1d0] sm:$0xff]
    %v82 = vld [vmem:[#allocation2 + $0x1d8] sm:$0xff]
    %v83 = vld [vmem:[#allocation2 + $0x1e0] sm:$0xff]
    %v84 = vld [vmem:[#allocation2 + $0x1e8] sm:$0xff]
    %v85 = vld [vmem:[#allocation2 + $0x1f0] sm:$0xff]
    %v86 = vld [vmem:[#allocation2 + $0x1f8] sm:$0xff]
    %v87 = vand.u32 2147483647, %v23
    %v88 = vand.u32 2147483647, %v24
    %v89 = vand.u32 2147483647, %v25
    %v90 = vand.u32 2147483647, %v26
    %v91 = vand.u32 2147483647, %v27
    %v92 = vand.u32 2147483647, %v28
    %v93 = vand.u32 2147483647, %v29
    %v94 = vand.u32 2147483647, %v30
    %v95 = vand.u32 2147483647, %v31
    %v96 = vand.u32 2147483647, %v32
    %v97 = vand.u32 2147483647, %v33
    %v98 = vand.u32 2147483647, %v34
    %v99 = vand.u32 2147483647, %v35
    %v100 = vand.u32 2147483647, %v36
    %v101 = vand.u32 2147483647, %v37
    %v102 = vand.u32 2147483647, %v38
    %v103 = vand.u32 2147483647, %v39
    %v104 = vand.u32 2147483647, %v40
    %v105 = vand.u32 2147483647, %v41
    %v106 = vand.u32 2147483647, %v42
    %v107 = vand.u32 2147483647, %v43
    %v108 = vand.u32 2147483647, %v44
    %v109 = vand.u32 2147483647, %v45
    %v110 = vand.u32 2147483647, %v46
    %v111 = vand.u32 2147483647, %v47
    %v112 = vand.u32 2147483647, %v48
    %v113 = vand.u32 2147483647, %v49
    %v114 = vand.u32 2147483647, %v50
    %v115 = vand.u32 2147483647, %v51
    %v116 = vand.u32 2147483647, %v52
    %v117 = vand.u32 2147483647, %v53
    %v118 = vand.u32 2147483647, %v54
    %v119 = vand.u32 2147483647, %v55
    %v120 = vand.u32 2147483647, %v56
    %v121 = vand.u32 2147483647, %v57
    %v122 = vand.u32 2147483647, %v58
    %v123 = vand.u32 2147483647, %v59
    %v124 = vand.u32 2147483647, %v60
    %v125 = vand.u32 2147483647, %v61
    %v126 = vand.u32 2147483647, %v62
    %v127 = vand.u32 2147483647, %v63
    %v128 = vand.u32 2147483647, %v64
    %v129 = vand.u32 2147483647, %v65
    %v130 = vand.u32 2147483647, %v66
    %v131 = vand.u32 2147483647, %v67
    %v132 = vand.u32 2147483647, %v68
    %v133 = vand.u32 2147483647, %v69
    %v134 = vand.u32 2147483647, %v70
    %v135 = vand.u32 2147483647, %v71
    %v136 = vand.u32 2147483647, %v72
    %v137 = vand.u32 2147483647, %v73
    %v138 = vand.u32 2147483647, %v74
    %v139 = vand.u32 2147483647, %v75
    %v140 = vand.u32 2147483647, %v76
    %v141 = vand.u32 2147483647, %v77
    %v142 = vand.u32 2147483647, %v78
    %v143 = vand.u32 2147483647, %v79
    %v144 = vand.u32 2147483647, %v80
    %v145 = vand.u32 2147483647, %v81
    %v146 = vand.u32 2147483647, %v82
    %v147 = vand.u32 2147483647, %v83
    %v148 = vand.u32 2147483647, %v84
    %v149 = vand.u32 2147483647, %v85
    %v150 = vand.u32 2147483647, %v86
    %v151 = vmax.f32 %v87, %v91
    %v152 = vmax.f32 %v88, %v92
    %v153 = vmax.f32 %v89, %v93
    %v154 = vmax.f32 %v90, %v94
    %v155 = vmax.f32 %v151, %v95
    %v156 = vmax.f32 %v152, %v96
    %v157 = vmax.f32 %v153, %v97
    %v158 = vmax.f32 %v154, %v98
    %v159 = vmax.f32 %v155, %v99
    %v160 = vmax.f32 %v156, %v100
    %v161 = vmax.f32 %v157, %v101
    %v162 = vmax.f32 %v158, %v102
    %v163 = vmax.f32 %v159, %v103
    %v164 = vmax.f32 %v160, %v104
    %v165 = vmax.f32 %v161, %v105
    %v166 = vmax.f32 %v162, %v106
    %v167 = vmax.f32 %v163, %v107
    %v168 = vmax.f32 %v164, %v108
    %v169 = vmax.f32 %v165, %v109
    %v170 = vmax.f32 %v166, %v110
    %v171 = vmax.f32 %v167, %v111
    %v172 = vmax.f32 %v168, %v112
    %v173 = vmax.f32 %v169, %v113
    %v174 = vmax.f32 %v170, %v114
    %v175 = vmax.f32 %v171, %v115
    %v176 = vmax.f32 %v172, %v116
    %v177 = vmax.f32 %v173, %v117
    %v178 = vmax.f32 %v174, %v118
    %v179 = vmax.f32 %v175, %v119
    %v180 = vmax.f32 %v176, %v120
    %v181 = vmax.f32 %v177, %v121
    %v182 = vmax.f32 %v178, %v122
    %v183 = vmax.f32 %v179, %v123
    %v184 = vmax.f32 %v180, %v124
    %v185 = vmax.f32 %v181, %v125
    %v186 = vmax.f32 %v182, %v126
    %v187 = vmax.f32 %v183, %v127
    %v188 = vmax.f32 %v184, %v128
    %v189 = vmax.f32 %v185, %v129
    %v190 = vmax.f32 %v186, %v130
    %v191 = vmax.f32 %v187, %v131
    %v192 = vmax.f32 %v188, %v132
    %v193 = vmax.f32 %v189, %v133
    %v194 = vmax.f32 %v190, %v134
    %v195 = vmax.f32 %v191, %v135
    %v196 = vmax.f32 %v192, %v136
    %v197 = vmax.f32 %v193, %v137
    %v198 = vmax.f32 %v194, %v138
    %v199 = vmax.f32 %v195, %v139
    %v200 = vmax.f32 %v196, %v140
    %v201 = vmax.f32 %v197, %v141
    %v202 = vmax.f32 %v198, %v142
    %v203 = vmax.f32 %v199, %v143
    %v204 = vmax.f32 %v200, %v144
    %v205 = vmax.f32 %v201, %v145
    %v206 = vmax.f32 %v202, %v146
    %v207 = vmax.f32 %v203, %v147
    %v208 = vmax.f32 %v204, %v148
    %v209 = vmax.f32 %v205, %v149
    %v210 = vmax.f32 %v206, %v150
    %v211 = vmax.f32 %v207, %v208
    %v212 = vmax.f32 %v209, %v210
    %v213 = vmax.f32 %v211, %v212
    %v214 = vrot.slane %v213, 4
    %v215 = vmax.f32 %v213, %v214
    %v216 = vrot.slane %v215, 2
    %v217 = vmax.f32 %v215, %v216
    %v218 = vrot.slane %v217, 1
    %v219 = vmax.f32 %v217, %v218
    %220 = vst [vmem:[#allocation5] sm:$0xff] %v219
    // Predicated region
    $region10: #{tpu_custom_call.1} parent=1 // pred_check
      _
    $region11: #{tpu_custom_call.1} parent=1 // pred_check_branch
      %222 = sbr.rel (0) target = $region13
    $region12: #{tpu_custom_call.1} parent=1 // pred_region
      %s224 = ssub.s32 128, 128
      %225 = vsyncadd [#allocation4], %s224
      %s227 = sshll.u32 [#allocation5], 4
      %s228 = int_to_ptr.vmem [resolvable:$true] %s227
      %230 = dma.vmem_to_hbm [thread:$0]  %s228, 128, %s1, [#allocation4]
    $region13: #{tpu_custom_call.1} parent=1 // pred_fallthru
      _
    // Predicated region
    $region14: #{tpu_custom_call.1} parent=1 // pred_check
      _
    $region15: #{tpu_custom_call.1} parent=1 // pred_check_branch
      %232 = sbr.rel (0) target = $region17
    $region16: #{tpu_custom_call.1} parent=1 // pred_region
      %233 = dma.done [#allocation4], 128
    $region17: #{tpu_custom_call.1} parent=1 // pred_fallthru
      _
    %234 = vsyncpa [#allocation3], 1
    %235 = vsyncpa [#allocation4], 1

</llo_original>
